<compile_context>
chip_gen: v6e
topology: v6e:2x2x1
jax: 0.10.0
libtpu: 0.0.40
codegen_flags: <defaults>
</compile_context>

<pallas_src>
import functools
import math

import jax
import jax.numpy as jnp
import numpy as np
from jax import lax
from jax.experimental import pallas as pl
from jax.experimental.pallas import tpu as pltpu

_INV_SQRT2 = 1.0 / math.sqrt(2.0)


def _cdiv(a, b):
    return -(-a // b)


def _round_up(a, b):
    return _cdiv(a, b) * b


def _gelu(z, approximate):
    if approximate:
        # tanh approximation -> EUP (separate VLIW slot), overlaps MXU/VPU work.
        return jax.nn.gelu(z, approximate=True)
    # PyTorch nn.GELU default = exact erf formulation.
    return 0.5 * z * (1.0 + lax.erf(z * _INV_SQRT2))


def gmlp_kernel(x_ref, w1_ref, b1_ref, w2_ref, b2_ref, o_ref, *,
                precision, approximate_gelu):
    # x_ref:  (1, Cin, T)     channels-first tile, spatial on lanes
    # w1_ref: (2*Hd, Cin)     fused fc1 weight ([a-rows ; z-rows], PyTorch out x in)
    # b1_ref: (2*Hd, 1)       f32 bias column
    # w2_ref: (Cout, Hd)      fc2 weight
    # b2_ref: (Cout, 1)       f32 bias column
    # o_ref:  (1, Cout, T)
    w1 = w1_ref[...]
    x = x_ref[0]                                    # (Cin, T)
    if x.dtype != w1.dtype:
        x = x.astype(w1.dtype)

    # Single fused fc1 matmul (fills the 256-wide MXU on v6e/v7x).
    h = jnp.dot(w1, x, preferred_element_type=jnp.float32,
                precision=precision) + b1_ref[...]   # (2*Hd, T) f32

    hd = w2_ref.shape[1]
    a = h[:hd]                                       # sublane slice (Hd % sub == 0)
    z = h[hd:]
    gated = (a * _gelu(z, approximate_gelu)).astype(w2_ref.dtype)

    y = jnp.dot(w2_ref[...], gated, preferred_element_type=jnp.float32,
                precision=precision) + b2_ref[...]   # (Cout, T) f32
    o_ref[0] = y.astype(o_ref.dtype)


def gmlp_forward(x_nchw, w1, b1, w2, b2, *, tile_hw=4096,
                 compute_dtype=None,
                 precision=jax.lax.Precision.HIGHEST,
                 approximate_gelu=False):
    """x_nchw: (B, Cin, H, W); PyTorch-layout weights:
    w1 (2*Hd, Cin), b1 (2*Hd,), w2 (Cout, Hd), b2 (Cout,)."""
    B, Cin, H, W = x_nchw.shape
    two_hd, cin_w = w1.shape
    assert cin_w == Cin
    hidden = two_hd // 2
    Cout, hid_w = w2.shape
    assert hid_w == hidden
    hw = H * W

    in_dtype = x_nchw.dtype
    w_dtype = jnp.dtype(compute_dtype) if compute_dtype is not None else jnp.dtype(w1.dtype)
    in_isz = np.dtype(in_dtype).itemsize
    w_isz = np.dtype(w_dtype).itemsize

    # --- weight prep (one-time, tiny) -------------------------------------
    # Pad hidden to the sublane multiple so the in-kernel a/z split is a clean
    # sublane slice; padded rows are zero (and w2 gets matching zero columns),
    # so the result is exact.
    sub = max(8, 32 // w_isz)
    hd_pad = _round_up(hidden, sub)

    wa, wz = w1[:hidden], w1[hidden:]
    if hd_pad != hidden:
        zrow = jnp.zeros((hd_pad - hidden, Cin), w1.dtype)
        wa = jnp.concatenate([wa, zrow], axis=0)
        wz = jnp.concatenate([wz, zrow], axis=0)
    w1f = jnp.concatenate([wa, wz], axis=0).astype(w_dtype)        # (2*hd_pad, Cin)

    b1f = b1.astype(jnp.float32)
    ba = jnp.pad(b1f[:hidden], (0, hd_pad - hidden))
    bz = jnp.pad(b1f[hidden:], (0, hd_pad - hidden))
    b1c = jnp.concatenate([ba, bz]).reshape(2 * hd_pad, 1)          # f32 column

    w2p = w2.astype(w_dtype)
    if hd_pad != hidden:
        w2p = jnp.pad(w2p, ((0, 0), (0, hd_pad - hidden)))           # (Cout, hd_pad)
    b2c = b2.astype(jnp.float32).reshape(Cout, 1)

    # --- generation-aware tile / VMEM budgeting ----------------------------
    try:
        vmem_cap = int(pltpu.get_tpu_info().vmem_capacity_bytes)
    except Exception:
        vmem_cap = 64 << 20                      # safe fallback (v7x-sized)
    # Never request all of physical VMEM (leave compiler scratch headroom):
    # ~48 MiB on v7x (64 MiB/TC), ~108 MiB on v5e/v6e (128 MiB).
    usable = max(16 << 20, min(int(vmem_cap * 0.85), vmem_cap - (16 << 20)))

    # Bytes that scale with the spatial tile (per lane):
    per_lane = (2 * Cin * in_isz                 # x tile, double-buffered
                + 2 * Cout * in_isz              # out tile, double-buffered
                + (4 * hd_pad + 2 * Cout) * 4)   # h, gated, y f32 intermediates
    fixed = ((w1f.size + w2p.size) * w_isz       # weights (single-buffered)
             + (b1c.size + b2c.size) * 4)

    tile = max(128, (int(tile_hw) // 128) * 128)
    tile = min(tile, _round_up(hw, 128))         # never bigger than the extent
    budget = int(usable * 0.8) - fixed
    if budget > 0:
        tile = min(tile, max(128, (budget // per_lane // 128) * 128))
    # v7x has 2 TensorCores: keep the grid product >= 2 when the shape allows.
    if B * _cdiv(hw, tile) < 2 and hw > 128:
        tile = min(tile, _round_up(_cdiv(hw, 2), 128))

    n_sp = _cdiv(hw, tile)                       # unpadded grid; final block masked
    grid = (B, n_sp)
    vmem_limit = int(min(usable, max(4 * (fixed + per_lane * tile), 32 << 20)))

    # NCHW -> (B, Cin, H*W): contiguous collapse, no transpose, no pad.
    x3 = x_nchw.reshape(B, Cin, hw)

    m_total = B * hw
    cost = pl.CostEstimate(
        flops=int(2 * m_total * (Cin * 2 * hd_pad + hd_pad * Cout)),
        transcendentals=int(m_total * hd_pad),
        bytes_accessed=int((x3.size + B * Cout * hw) * in_isz
                           + (w1f.size + w2p.size) * w_isz
                           + (b1c.size + b2c.size) * 4),
    )

    kernel = functools.partial(gmlp_kernel, precision=precision,
                               approximate_gelu=approximate_gelu)
    const_buf = pl.Buffered(1)                   # constant index_map -> 1 buffer

    out3 = pl.pallas_call(
        kernel,
        out_shape=jax.ShapeDtypeStruct((B, Cout, hw), in_dtype),
        grid_spec=pltpu.PrefetchScalarGridSpec(
            num_scalar_prefetch=0,
            grid=grid,
            in_specs=[
                pl.BlockSpec((1, Cin, tile), lambda b, i: (b, 0, i)),
                pl.BlockSpec((2 * hd_pad, Cin), lambda b, i: (0, 0),
                             pipeline_mode=const_buf),
                pl.BlockSpec((2 * hd_pad, 1), lambda b, i: (0, 0),
                             pipeline_mode=const_buf),
                pl.BlockSpec((Cout, hd_pad), lambda b, i: (0, 0),
                             pipeline_mode=const_buf),
                pl.BlockSpec((Cout, 1), lambda b, i: (0, 0),
                             pipeline_mode=const_buf),
            ],
            out_specs=pl.BlockSpec((1, Cout, tile), lambda b, i: (b, 0, i)),
        ),
        compiler_params=pltpu.CompilerParams(
            dimension_semantics=("parallel", "parallel"),
            vmem_limit_bytes=vmem_limit),
        cost_estimate=cost,
    )(x3, w1f, b1c, w2p, b2c)

    return out3.reshape(B, Cout, H, W)


def gmlp_reference(x_nchw, w1, b1, w2, b2, *,
                   precision=jax.lax.Precision.HIGHEST, approximate_gelu=False):
    # Pure-JAX reference of the same math (1x1 convs == per-pixel linears).
    x = x_nchw.astype(jnp.float32)
    h = jnp.einsum('bchw,oc->bohw', x, w1.astype(jnp.float32),
                   precision=precision) + b1.astype(jnp.float32)[None, :, None, None]
    hidden = w2.shape[1]
    a, z = h[:, :hidden], h[:, hidden:]
    gated = a * _gelu(z, approximate_gelu)
    y = jnp.einsum('bchw,oc->bohw', gated, w2.astype(jnp.float32),
                   precision=precision) + b2.astype(jnp.float32)[None, :, None, None]
    return y.astype(x_nchw.dtype)


def init_gmlp_params(key, in_features, hidden_features, out_features, dtype=jnp.float32):
    """Deterministic init mimicking nn.Linear, stored in PyTorch (out, in) layout."""
    k1, k2, k3, k4 = jax.random.split(key, 4)
    bound1 = 1.0 / math.sqrt(in_features)
    bound2 = 1.0 / math.sqrt(hidden_features)
    w1 = jax.random.uniform(k1, (2 * hidden_features, in_features),
                            minval=-bound1, maxval=bound1, dtype=dtype)
    b1 = jax.random.uniform(k2, (2 * hidden_features,),
                            minval=-bound1, maxval=bound1, dtype=dtype)
    w2 = jax.random.uniform(k3, (out_features, hidden_features),
                            minval=-bound2, maxval=bound2, dtype=dtype)
    b2 = jax.random.uniform(k4, (out_features,),
                            minval=-bound2, maxval=bound2, dtype=dtype)
    return w1, b1, w2, b2


if __name__ == "__main__":
    key = jax.random.PRNGKey(0)
    kx, kp = jax.random.split(key)

    B, C, H, W = 2, 4, 16, 16           # NCHW input
    hidden_features = 8
    out_features = C                     # out_features defaults to in_features

    x = jax.random.normal(kx, (B, C, H, W), dtype=jnp.float32)
    w1, b1, w2, b2 = init_gmlp_params(kp, C, hidden_features, out_features)

    out = jax.block_until_ready(gmlp_forward(x, w1, b1, w2, b2))
    ref = jax.block_until_ready(gmlp_reference(x, w1, b1, w2, b2))
    np.testing.assert_allclose(np.asarray(out), np.asarray(ref), rtol=2e-5, atol=2e-5)

    print("KERNEL_OK")
</pallas_src>

<mosaic_0001>
module attributes {stable_mosaic.version = 11 : i64} {
  func.func @gmlp_kernel(%arg0: i32, %arg1: i32, %arg2: memref<1x4x256xf32, #tpu.memory_space<vmem>>, %arg3: memref<16x4xf32, #tpu.memory_space<vmem>>, %arg4: memref<16x1xf32, #tpu.memory_space<vmem>>, %arg5: memref<4x8xf32, #tpu.memory_space<vmem>>, %arg6: memref<4x1xf32, #tpu.memory_space<vmem>>, %arg7: memref<1x4x256xf32, #tpu.memory_space<vmem>>) attributes {dimension_semantics = [#tpu.dimension_semantics<parallel>, #tpu.dimension_semantics<parallel>], iteration_bounds = array<i64: 2, 1>, scalar_prefetch = 0 : i64, scratch_operands = 0 : i64, tpu.core_type = #tpu.core_type<tc>, window_params = [{transform_indices = @transform_0, window_bounds = array<i64: 1, 4, 256>}, {pipeline_mode = #tpu.pipeline_mode<synchronous>, transform_indices = @transform_1, window_bounds = array<i64: 16, 4>}, {pipeline_mode = #tpu.pipeline_mode<synchronous>, transform_indices = @transform_2, window_bounds = array<i64: 16, 1>}, {pipeline_mode = #tpu.pipeline_mode<synchronous>, transform_indices = @transform_3, window_bounds = array<i64: 4, 8>}, {pipeline_mode = #tpu.pipeline_mode<synchronous>, transform_indices = @transform_4, window_bounds = array<i64: 4, 1>}, {transform_indices = @transform_5, window_bounds = array<i64: 1, 4, 256>}]} {
    %c0 = arith.constant 0 : index
    %c0_0 = arith.constant 0 : index
    %0 = vector.load %arg3[%c0, %c0_0] : memref<16x4xf32, #tpu.memory_space<vmem>>, vector<16x4xf32>
    %c0_1 = arith.constant 0 : index
    %c0_2 = arith.constant 0 : index
    %c0_3 = arith.constant 0 : index
    %1 = vector.load %arg2[%c0_1, %c0_2, %c0_3] : memref<1x4x256xf32, #tpu.memory_space<vmem>>, vector<1x4x256xf32>
    %2 = vector.shape_cast %1 : vector<1x4x256xf32> to vector<4x256xf32>
    %cst = arith.constant dense<0.000000e+00> : vector<16x256xf32>
    %3 = tpu.matmul %0, %2, %cst {dimension_numbers = #tpu.dot_dimension_numbers<[1], [0], [0], [1], [0, 0, 1, 1], [], []>, precision = #tpu.contract_precision<fp32>} : vector<16x4xf32>, vector<4x256xf32>, vector<16x256xf32> -> vector<16x256xf32>
    %c0_4 = arith.constant 0 : index
    %c0_5 = arith.constant 0 : index
    %4 = vector.load %arg4[%c0_4, %c0_5] : memref<16x1xf32, #tpu.memory_space<vmem>>, vector<16x1xf32>
    %5 = vector.broadcast %4 : vector<16x1xf32> to vector<16x256xf32>
    %6 = arith.addf %3, %5 : vector<16x256xf32>
    %7 = vector.extract_strided_slice %6 {offsets = [0, 0], sizes = [8, 256], strides = [1, 1]} : vector<16x256xf32> to vector<8x256xf32>
    %8 = vector.extract_strided_slice %6 {offsets = [8, 0], sizes = [8, 256], strides = [1, 1]} : vector<16x256xf32> to vector<8x256xf32>
    %cst_6 = arith.constant 5.000000e-01 : f32
    %9 = vector.broadcast %cst_6 : f32 to vector<8x256xf32>
    %10 = arith.mulf %9, %8 : vector<8x256xf32>
    %cst_7 = arith.constant 0.707106769 : f32
    %11 = vector.broadcast %cst_7 : f32 to vector<8x256xf32>
    %12 = arith.mulf %8, %11 : vector<8x256xf32>
    %13 = math.erf %12 : vector<8x256xf32>
    %cst_8 = arith.constant 1.000000e+00 : f32
    %14 = vector.broadcast %cst_8 : f32 to vector<8x256xf32>
    %15 = arith.addf %14, %13 : vector<8x256xf32>
    %16 = arith.mulf %10, %15 : vector<8x256xf32>
    %17 = arith.mulf %7, %16 : vector<8x256xf32>
    %c0_9 = arith.constant 0 : index
    %c0_10 = arith.constant 0 : index
    %18 = vector.load %arg5[%c0_9, %c0_10] : memref<4x8xf32, #tpu.memory_space<vmem>>, vector<4x8xf32>
    %cst_11 = arith.constant dense<0.000000e+00> : vector<4x256xf32>
    %19 = tpu.matmul %18, %17, %cst_11 {dimension_numbers = #tpu.dot_dimension_numbers<[1], [0], [0], [1], [0, 0, 1, 1], [], []>, precision = #tpu.contract_precision<fp32>} : vector<4x8xf32>, vector<8x256xf32>, vector<4x256xf32> -> vector<4x256xf32>
    %c0_12 = arith.constant 0 : index
    %c0_13 = arith.constant 0 : index
    %20 = vector.load %arg6[%c0_12, %c0_13] : memref<4x1xf32, #tpu.memory_space<vmem>>, vector<4x1xf32>
    %21 = vector.broadcast %20 : vector<4x1xf32> to vector<4x256xf32>
    %22 = arith.addf %19, %21 : vector<4x256xf32>
    %c0_14 = arith.constant 0 : index
    %c0_15 = arith.constant 0 : index
    %c0_16 = arith.constant 0 : index
    %23 = vector.load %arg7[%c0_14, %c0_15, %c0_16] : memref<1x4x256xf32, #tpu.memory_space<vmem>>, vector<1x4x256xf32>
    %24 = vector.shape_cast %23 : vector<1x4x256xf32> to vector<4x256xf32>
    %25 = vector.shape_cast %22 : vector<4x256xf32> to vector<1x4x256xf32>
    tpu.vector_store %arg7[%c0_14, %c0_15, %c0_16], %25 {strides = array<i32>} : memref<1x4x256xf32, #tpu.memory_space<vmem>>, vector<1x4x256xf32>,
    return
  }
  func.func @transform_0(%arg0: i32, %arg1: i32) -> (i32, i32, i32) {
    %c0_i32 = arith.constant 0 : i32
    %c0_i32_0 = arith.constant 0 : i32
    return %arg0, %c0_i32, %arg1 : i32, i32, i32
  }
  func.func @transform_1(%arg0: i32, %arg1: i32) -> (i32, i32) {
    %c0_i32 = arith.constant 0 : i32
    %c0_i32_0 = arith.constant 0 : i32
    %c0_i32_1 = arith.constant 0 : i32
    return %c0_i32, %c0_i32_0 : i32, i32
  }
  func.func @transform_2(%arg0: i32, %arg1: i32) -> (i32, i32) {
    %c0_i32 = arith.constant 0 : i32
    %c0_i32_0 = arith.constant 0 : i32
    %c0_i32_1 = arith.constant 0 : i32
    return %c0_i32, %c0_i32_0 : i32, i32
  }
  func.func @transform_3(%arg0: i32, %arg1: i32) -> (i32, i32) {
    %c0_i32 = arith.constant 0 : i32
    %c0_i32_0 = arith.constant 0 : i32
    %c0_i32_1 = arith.constant 0 : i32
    return %c0_i32, %c0_i32_0 : i32, i32
  }
  func.func @transform_4(%arg0: i32, %arg1: i32) -> (i32, i32) {
    %c0_i32 = arith.constant 0 : i32
    %c0_i32_0 = arith.constant 0 : i32
    %c0_i32_1 = arith.constant 0 : i32
    return %c0_i32, %c0_i32_0 : i32, i32
  }
  func.func @transform_5(%arg0: i32, %arg1: i32) -> (i32, i32, i32) {
    %c0_i32 = arith.constant 0 : i32
    %c0_i32_0 = arith.constant 0 : i32
    return %arg0, %c0_i32, %arg1 : i32, i32, i32
  }
}

</mosaic_0001>

<llo_original>
// kernel: tpu_custom_call.1
$region0: #{tpu_custom_call.1}
  #allocation0 [shape = 'u32[]', space=smem, size = 0x4, offset = 0x4, fixed_abs, tag = 'smem constant byte address 0x4 - core index']
  #allocation1 [shape = 'u32[144,128]{1,0:T(1,128)}', space=vmem, size = 0x12000, scoped, tag = 'internal scratch']
  %s0 = inlined_call_operand.vmem [shape: f32[2,4,256], index: 0, kind: input, shape index: {}]
  %s1 = inlined_call_operand.vmem [shape: f32[16,4], index: 1, kind: input, shape index: {}]
  %s2 = inlined_call_operand.vmem [shape: f32[16,1], index: 2, kind: input, shape index: {}]
  %s3 = inlined_call_operand.vmem [shape: f32[4,8], index: 3, kind: input, shape index: {}]
  %s4 = inlined_call_operand.vmem [shape: f32[4,1], index: 4, kind: input, shape index: {}]
  %s5 = inlined_call_operand.hbm [shape: f32[2,4,256], index: 5, kind: output, shape index: {}]
  %s6 = sld [smem:[#allocation0]]
  $region53: #{tpu_custom_call.1} parent=0
    _
  %s8 = ssub.s32 1, %s6
  %s9 = scalar_select 0, %s8, %s6
  $region1: #{tpu_custom_call.1} parent=0
    #allocation2 [shape = 'u8[8192]{0}', space=vmem, size = 0x2000, scoped, tag = 'output window, operand 0']
    #allocation3 [shape = 's32[2]{0}', space=sflag, size = 0x8, scoped, tag = 'scoped memory for tpu_custom_call.1']
    %10 = vsyncpa [#allocation3], 0
    %s11 = scalar_lea.sflag [#allocation3], 1
    %12 = vsyncpa %s11, 0
    loop: start=0, step=1, limit=4
    $region2: #{tpu_custom_call.1} parent=1 // loop_pre_header
      _
    $region3: #{tpu_custom_call.1} parent=1 // loop_header
      %s14 = sphi 0, %s18
      %p15 = scmp.ge.s32.totalorder %s14, 4
      %s21 = sphi 0, %s33
      %s22 = sphi 0, %s29
      %s23 = sphi 0, %s21
      %s24 = sphi 0, %s22
      %s25 = sphi 0, %s23
      %s26 = sphi 0, %s24
      %s38 = sphi 0, %s40
      %s41 = sphi 0, %s38
      %s42 = sphi 0, %s41
      %s58 = sphi 0, %s42
      %s62 = sphi 0, %s62
      %s64 = sphi 0, %s62
      %s65 = sphi 0, %s64
      %s79 = sphi 0, %s65
      %s83 = sphi 0, %s83
      %s85 = sphi 0, %s83
      %s86 = sphi 0, %s85
      %s100 = sphi 0, %s86
      %s104 = sphi 0, %s104
      %s106 = sphi 0, %s104
      %s107 = sphi 0, %s106
      %s121 = sphi 0, %s107
      %s125 = sphi 0, %s125
      %s127 = sphi 0, %s125
      %s128 = sphi 0, %s127
      %s142 = sphi 0, %s128
      %s150 = sphi 0, %s152
      %s153 = sphi 0, %s150
      %s154 = sphi 0, %s153
      %s170 = sphi 0, %s154
    $region4: #{tpu_custom_call.1} parent=1 // loop_header_branch
      %17 = sbr.rel (%p15) target = $region8
    $region5: #{tpu_custom_call.1} parent=1 // loop_body
      %s19 = ssub.s32 %s14, 1
      %s20 = ssub.s32 %s14, 2
      %s27 = sadd.s32 1, %s22
      %p28 = scmp.ge.s32.totalorder %s27, 1
      %s29 = scalar_select %p28, 0, %s27
      %s30 = sadd.s32 1, %s21
      %s31 = scalar_select %p28, %s30, %s21
      %p32 = scmp.ge.s32.totalorder %s31, 2
      %s33 = scalar_select %p32, 0, %s31
      %s34 = ssub.s32 %s21, %s33
      %s35 = ssub.s32 %s22, %s29
      %s36 = sor.u32 %s34, %s35
      %p37 = scmp.eq.s32.totalorder %s36, 0
      %s39 = sadd.s32 %s38, 1
      %s40 = scalar_select %p37, %s38, %s39
      %p43 = pneg %p37
      %p44 = scmp.eq.s32.totalorder %s14, 1
      %p45 = por %p43, %p44
      %p46 = scmp.ne.s32.totalorder %s38, %s41
      %p47 = scmp.eq.s32.totalorder %s14, 0
      %p48 = por %p46, %p47
      %p49 = scmp.ne.s32.totalorder %s38, %s41
      %p50 = scmp.eq.s32.totalorder %s19, 1
      %p51 = por %p49, %p50
      %p52 = scmp.ne.s32.totalorder %s41, %s42
      %p53 = scmp.eq.s32.totalorder %s19, 0
      %p54 = por %p52, %p53
      %p55 = scmp.ne.s32.totalorder %s41, %s42
      %p56 = scmp.eq.s32.totalorder %s20, 1
      %p57 = por %p55, %p56
      %p59 = scmp.ne.s32.totalorder %s42, %s58
      %p60 = scmp.eq.s32.totalorder %s20, 0
      %p61 = por %p59, %p60
      %s63 = sadd.s32 %s62, 1
      %p66 = scmp.eq.s32.totalorder %s14, 1
      %p67 = scmp.ne.s32.totalorder %s62, %s64
      %p68 = scmp.eq.s32.totalorder %s14, 0
      %p69 = por %p67, %p68
      %p70 = scmp.ne.s32.totalorder %s62, %s64
      %p71 = scmp.eq.s32.totalorder %s19, 1
      %p72 = por %p70, %p71
      %p73 = scmp.ne.s32.totalorder %s64, %s65
      %p74 = scmp.eq.s32.totalorder %s19, 0
      %p75 = por %p73, %p74
      %p76 = scmp.ne.s32.totalorder %s64, %s65
      %p77 = scmp.eq.s32.totalorder %s20, 1
      %p78 = por %p76, %p77
      %p80 = scmp.ne.s32.totalorder %s65, %s79
      %p81 = scmp.eq.s32.totalorder %s20, 0
      %p82 = por %p80, %p81
      %s84 = sadd.s32 %s83, 1
      %p87 = scmp.eq.s32.totalorder %s14, 1
      %p88 = scmp.ne.s32.totalorder %s83, %s85
      %p89 = scmp.eq.s32.totalorder %s14, 0
      %p90 = por %p88, %p89
      %p91 = scmp.ne.s32.totalorder %s83, %s85
      %p92 = scmp.eq.s32.totalorder %s19, 1
      %p93 = por %p91, %p92
      %p94 = scmp.ne.s32.totalorder %s85, %s86
      %p95 = scmp.eq.s32.totalorder %s19, 0
      %p96 = por %p94, %p95
      %p97 = scmp.ne.s32.totalorder %s85, %s86
      %p98 = scmp.eq.s32.totalorder %s20, 1
      %p99 = por %p97, %p98
      %p101 = scmp.ne.s32.totalorder %s86, %s100
      %p102 = scmp.eq.s32.totalorder %s20, 0
      %p103 = por %p101, %p102
      %s105 = sadd.s32 %s104, 1
      %p108 = scmp.eq.s32.totalorder %s14, 1
      %p109 = scmp.ne.s32.totalorder %s104, %s106
      %p110 = scmp.eq.s32.totalorder %s14, 0
      %p111 = por %p109, %p110
      %p112 = scmp.ne.s32.totalorder %s104, %s106
      %p113 = scmp.eq.s32.totalorder %s19, 1
      %p114 = por %p112, %p113
      %p115 = scmp.ne.s32.totalorder %s106, %s107
      %p116 = scmp.eq.s32.totalorder %s19, 0
      %p117 = por %p115, %p116
      %p118 = scmp.ne.s32.totalorder %s106, %s107
      %p119 = scmp.eq.s32.totalorder %s20, 1
      %p120 = por %p118, %p119
      %p122 = scmp.ne.s32.totalorder %s107, %s121
      %p123 = scmp.eq.s32.totalorder %s20, 0
      %p124 = por %p122, %p123
      %s126 = sadd.s32 %s125, 1
      %p129 = scmp.eq.s32.totalorder %s14, 1
      %p130 = scmp.ne.s32.totalorder %s125, %s127
      %p131 = scmp.eq.s32.totalorder %s14, 0
      %p132 = por %p130, %p131
      %p133 = scmp.ne.s32.totalorder %s125, %s127
      %p134 = scmp.eq.s32.totalorder %s19, 1
      %p135 = por %p133, %p134
      %p136 = scmp.ne.s32.totalorder %s127, %s128
      %p137 = scmp.eq.s32.totalorder %s19, 0
      %p138 = por %p136, %p137
      %p139 = scmp.ne.s32.totalorder %s127, %s128
      %p140 = scmp.eq.s32.totalorder %s20, 1
      %p141 = por %p139, %p140
      %p143 = scmp.ne.s32.totalorder %s128, %s142
      %p144 = scmp.eq.s32.totalorder %s20, 0
      %p145 = por %p143, %p144
      %s146 = ssub.s32 %s21, %s33
      %s147 = ssub.s32 %s22, %s29
      %s148 = sor.u32 %s146, %s147
      %p149 = scmp.eq.s32.totalorder %s148, 0
      %s151 = sadd.s32 %s150, 1
      %s152 = scalar_select %p149, %s150, %s151
      %p155 = pneg %p149
      %p156 = scmp.eq.s32.totalorder %s14, 1
      %p157 = por %p155, %p156
      %p158 = scmp.ne.s32.totalorder %s150, %s153
      %p159 = scmp.eq.s32.totalorder %s14, 0
      %p160 = por %p158, %p159
      %p161 = scmp.ne.s32.totalorder %s150, %s153
      %p162 = scmp.eq.s32.totalorder %s19, 1
      %p163 = por %p161, %p162
      %p164 = scmp.ne.s32.totalorder %s153, %s154
      %p165 = scmp.eq.s32.totalorder %s19, 0
      %p166 = por %p164, %p165
      %p167 = scmp.ne.s32.totalorder %s153, %s154
      %p168 = scmp.eq.s32.totalorder %s20, 1
      %p169 = por %p167, %p168
      %p171 = scmp.ne.s32.totalorder %s154, %s170
      %p172 = scmp.eq.s32.totalorder %s20, 0
      %p173 = por %p171, %p172
      %p174 = scmp.le.s32.totalorder 1, %s14
      %p175 = scmp.lt.s32.totalorder %s14, 3
      %p176 = pnand %p174, %p175
      %p177 = pneg %p176
      // Predicated region
      $region9: #{tpu_custom_call.1} parent=5 // pred_check
        _
      $region10: #{tpu_custom_call.1} parent=5 // pred_check_branch
        %179 = sbr.rel (%p176) target = $region12
      $region11: #{tpu_custom_call.1} parent=5 // pred_region
        %s180 = ssub.s32 %s14, 1
        // Predicated region
        $region13: #{tpu_custom_call.1} parent=11 // pred_check
          %p181 = pneg %p75
        $region14: #{tpu_custom_call.1} parent=11 // pred_check_branch
          %183 = sbr.rel (%p181) target = $region16
        $region15: #{tpu_custom_call.1} parent=11 // pred_region
          _
        $region16: #{tpu_custom_call.1} parent=11 // pred_fallthru
          _
        // Predicated region
        $region17: #{tpu_custom_call.1} parent=11 // pred_check
          %p184 = pneg %p96
        $region18: #{tpu_custom_call.1} parent=11 // pred_check_branch
          %186 = sbr.rel (%p184) target = $region20
        $region19: #{tpu_custom_call.1} parent=11 // pred_region
          _
        $region20: #{tpu_custom_call.1} parent=11 // pred_fallthru
          _
        // Predicated region
        $region21: #{tpu_custom_call.1} parent=11 // pred_check
          %p187 = pneg %p117
        $region22: #{tpu_custom_call.1} parent=11 // pred_check_branch
          %189 = sbr.rel (%p187) target = $region24
        $region23: #{tpu_custom_call.1} parent=11 // pred_region
          _
        $region24: #{tpu_custom_call.1} parent=11 // pred_fallthru
          _
        // Predicated region
        $region25: #{tpu_custom_call.1} parent=11 // pred_check
          %p190 = pneg %p138
        $region26: #{tpu_custom_call.1} parent=11 // pred_check_branch
          %192 = sbr.rel (%p190) target = $region28
        $region27: #{tpu_custom_call.1} parent=11 // pred_region
          _
        $region28: #{tpu_custom_call.1} parent=11 // pred_fallthru
          _
      $region12: #{tpu_custom_call.1} parent=5 // pred_fallthru
        _
      %p193 = scmp.lt.s32.totalorder %s14, 2
      // Predicated region
      $region29: #{tpu_custom_call.1} parent=5 // pred_check
        %p194 = pneg %p193
      $region30: #{tpu_custom_call.1} parent=5 // pred_check_branch
        %196 = sbr.rel (%p194) target = $region32
      $region31: #{tpu_custom_call.1} parent=5 // pred_region
        // Predicated region
        $region33: #{tpu_custom_call.1} parent=31 // pred_check
          %p197 = pneg %p48
        $region34: #{tpu_custom_call.1} parent=31 // pred_check_branch
          %199 = sbr.rel (%p197) target = $region36
        $region35: #{tpu_custom_call.1} parent=31 // pred_region
          %s200 = smul.u32 2, %s22
          %p201 = scmp.lt.s32.totalorder %s21, 1
          %s202 = scalar_select %p201, %s21, 1
          %p203 = scmp.lt.s32.totalorder %s200, 1
          %s204 = scalar_select %p203, %s200, 1
          %s205 = smul.addr %s202, 2
          %s206 = sadd.s32 %s204, %s205
          %s207 = smul.addr %s206, 4
          %s208 = scalar_lea.vmem %s0, %s207
          %s209 = smul.u32 2, %s22
        $region36: #{tpu_custom_call.1} parent=31 // pred_fallthru
          _
      $region32: #{tpu_custom_call.1} parent=5 // pred_fallthru
        _
      %p210 = scmp.le.s32.totalorder 1, %s14
      %p211 = scmp.lt.s32.totalorder %s14, 3
      %p212 = pnand %p210, %p211
      %p213 = pneg %p212
      // Predicated region
      $region37: #{tpu_custom_call.1} parent=5 // pred_check
        _
      $region38: #{tpu_custom_call.1} parent=5 // pred_check_branch
        %215 = sbr.rel (%p212) target = $region40
      $region39: #{tpu_custom_call.1} parent=5 // pred_region
        %s216 = ssub.s32 %s14, 1
        %s217 = smul.u32 2, %s24
        %p218 = scmp.lt.s32.totalorder %s23, 1
        %s219 = scalar_select %p218, %s23, 1
        %p220 = scmp.lt.s32.totalorder %s217, 1
        %s221 = scalar_select %p220, %s217, 1
        %s222 = smul.addr %s219, 2
        %s223 = sadd.s32 %s221, %s222
        %s224 = smul.addr %s223, 4
        %s225 = scalar_lea.vmem %s0, %s224
        %p226 = pneg %p54
        %p227 = pneg %p51
        %p228 = pneg %p75
        %p229 = pneg %p72
        %p230 = pneg %p96
        %p231 = pneg %p93
        %p232 = pneg %p117
        %p233 = pneg %p114
        %p234 = pneg %p138
        %p235 = pneg %p135
        %p236 = pneg %p166
        %p237 = pneg %p163
        %s238 = sand.u32 %s153, 1
        %s239 = scalar_lea.sflag [#allocation3], %s238
        %s240 = sand.u32 %s153, 1
        %s241 = smul.addr %s240, 8
        %s242 = scalar_lea.vmem [#allocation2], %s241
        %s243 = smul.u32 2, %s24
        %p244 = scmp.lt.s32.totalorder %s23, 1
        %s245 = scalar_select %p244, %s23, 1
        %p246 = scmp.lt.s32.totalorder %s243, 1
        %s247 = scalar_select %p246, %s243, 1
        %s248 = smul.addr %s245, 2
        %s249 = sadd.s32 %s247, %s248
        %s250 = smul.addr %s249, 4
        %s251 = scalar_lea.vmem %s0, %s250
        %s252 = smul.u32 2, %s24
        %s253 = smul.u32 2, %s24
        %v254 = vld [vmem:[%s1] sm:$0xff]
        %v255 = vld [vmem:[%s1 + $0x8] sm:$0xff]
        %v256 = vld [vmem:[%s251] sm:$0xff]
        %v257 = vld [vmem:[%s2] sm:$0xff]
        %v258 = vld [vmem:[%s2 + $0x8] sm:$0xff]
        %260 = vset.pattern.permute.xlu0 0
        %261 = vperm.xlu0 %260, %v257
        %v262 = vpop.permute.xlu0 %261
        %265 = vset.pattern.permute.xlu0 0
        %266 = vperm.xlu0 %265, %v258
        %v267 = vpop.permute.xlu0 %266
        %v270 = vcombine.high %v256, %v256
        %vm271 = vcmask 31744
        %v273 = vsel %vm271, %v254, 0
        %v276 = vsel %vm271, %v255, 0
        %vm278 = vcmask 1043456
        %v279 = vsel %vm278, %v256, 0
        %v281 = vsel %vm278, %v270, 0
        %283 = vmatprep.subr.mxu0 0.0
        %284 = vmatpush1.msra.mxu0 0.0
        %285 = vmatprep.subr.mxu0 0.0
        %286 = vmatpush1.msra.mxu0 0.0
        %287 = vmatprep.subr.mxu0 0.0
        %288 = vmatpush1.msra.mxu0 0.0
        %289 = vmatprep.subr.mxu0 0.0
        %290 = vmatpush1.msra.mxu0 0.0
        %291 = vmatprep.subr.mxu0 0.0
        %292 = vmatpush1.msra.mxu0 0.0
        %293 = vmatprep.subr.mxu0 0.0
        %294 = vmatpush1.msra.mxu0 0.0
        %295 = vmatprep.subr.mxu0 0.0
        %296 = vmatpush1.msra.mxu0 0.0
        %297 = vmatprep.subr.mxu0 0.0
        %298 = vmatpush1.msra.mxu0 0.0
        %299 = vmatprep.subr.mxu0 0.0
        %300 = vmatpush1.msra.mxu0 0.0
        %301 = vmatprep.subr.mxu0 0.0
        %302 = vmatpush1.msra.mxu0 0.0
        %303 = vmatprep.subr.mxu0 0.0
        %304 = vmatpush1.msra.mxu0 0.0
        %305 = vmatprep.subr.mxu0 0.0
        %306 = vmatpush1.msra.mxu0 0.0
        %307 = vmatprep.subr.mxu0 0.0
        %308 = vmatpush1.msra.mxu0 0.0
        %309 = vmatprep.subr.mxu0 0.0
        %310 = vmatpush1.msra.mxu0 0.0
        %311 = vmatprep.subr.mxu0 0.0
        %312 = vmatpush1.msra.mxu0 0.0
        %v313 = vand.u32 %v281, 4294901760
        %314 = vmatprep.subr.mxu0 %v313
        %v315 = vand.u32 %v279, 4294901760
        %316 = vmatpush1.msra.mxu0 %v315
        %317 = vmatprep.subr.mxu0 0.0
        %318 = vmatpush2.msra.mxu0 0.0
        %319 = vmatprep.subr.mxu0 0.0
        %320 = vmatpush2.msra.mxu0 0.0
        %321 = vmatprep.subr.mxu0 0.0
        %322 = vmatpush2.msra.mxu0 0.0
        %323 = vmatprep.subr.mxu0 0.0
        %324 = vmatpush2.msra.mxu0 0.0
        %325 = vmatprep.subr.mxu0 0.0
        %326 = vmatpush2.msra.mxu0 0.0
        %327 = vmatprep.subr.mxu0 0.0
        %328 = vmatpush2.msra.mxu0 0.0
        %329 = vmatprep.subr.mxu0 0.0
        %330 = vmatpush2.msra.mxu0 0.0
        %331 = vmatprep.subr.mxu0 0.0
        %332 = vmatpush2.msra.mxu0 0.0
        %333 = vmatprep.subr.mxu0 0.0
        %334 = vmatpush2.msra.mxu0 0.0
        %335 = vmatprep.subr.mxu0 0.0
        %336 = vmatpush2.msra.mxu0 0.0
        %337 = vmatprep.subr.mxu0 0.0
        %338 = vmatpush2.msra.mxu0 0.0
        %339 = vmatprep.subr.mxu0 0.0
        %340 = vmatpush2.msra.mxu0 0.0
        %341 = vmatprep.subr.mxu0 0.0
        %342 = vmatpush2.msra.mxu0 0.0
        %343 = vmatprep.subr.mxu0 0.0
        %344 = vmatpush2.msra.mxu0 0.0
        %345 = vmatprep.subr.mxu0 0.0
        %346 = vmatpush2.msra.mxu0 0.0
        %347 = vmatprep.subr.mxu0 0.0
        %348 = vmatpush2.msra.mxu0 0.0
        %349 = vmatprep.mubr.f32.mxu0 0.0
        %v350 = vand.u32 %v273, 4294901760
        %v351 = vsub.f32 %v273, %v350
        %v352 = vand.u32 %v351, 4294901760
        %v353 = vsub.f32 %v351, %v352
        %v354 = vand.u32 %v353, 4294901760
        %355 = vmatmul.mubr.f32.gmra.mxu0 %v354
        %v356 = vpop.f32.mrf.mxu0
        %v357 = vadd.f32 %v262, %v356
        %v358 = vpop.f32.mrf.mxu0
        %v359 = vadd.f32 %v262, %v358
        %360 = vmatprep.mubr.f32.mxu0 0.0
        %v361 = vand.u32 %v276, 4294901760
        %v362 = vsub.f32 %v276, %v361
        %v363 = vand.u32 %v362, 4294901760
        %v364 = vsub.f32 %v362, %v363
        %v365 = vand.u32 %v364, 4294901760
        %366 = vmatmul.mubr.f32.gmra.mxu0 %v365
        %v367 = vpop.f32.mrf.mxu0
        %v368 = vadd.f32 %v267, %v367
        %v369 = vpop.f32.mrf.mxu0
        %v370 = vadd.f32 %v267, %v369
        %371 = vdwg.mxu0
        %372 = vmatprep.subr.mxu0 0.0
        %373 = vmatpush1.msra.mxu0 0.0
        %374 = vmatprep.subr.mxu0 0.0
        %375 = vmatpush1.msra.mxu0 0.0
        %376 = vmatprep.subr.mxu0 0.0
        %377 = vmatpush1.msra.mxu0 0.0
        %378 = vmatprep.subr.mxu0 0.0
        %379 = vmatpush1.msra.mxu0 0.0
        %380 = vmatprep.subr.mxu0 0.0
        %381 = vmatpush1.msra.mxu0 0.0
        %382 = vmatprep.subr.mxu0 0.0
        %383 = vmatpush1.msra.mxu0 0.0
        %384 = vmatprep.subr.mxu0 0.0
        %385 = vmatpush1.msra.mxu0 0.0
        %386 = vmatprep.subr.mxu0 0.0
        %387 = vmatpush1.msra.mxu0 0.0
        %388 = vmatprep.subr.mxu0 0.0
        %389 = vmatpush1.msra.mxu0 0.0
        %390 = vmatprep.subr.mxu0 0.0
        %391 = vmatpush1.msra.mxu0 0.0
        %392 = vmatprep.subr.mxu0 0.0
        %393 = vmatpush1.msra.mxu0 0.0
        %394 = vmatprep.subr.mxu0 0.0
        %395 = vmatpush1.msra.mxu0 0.0
        %396 = vmatprep.subr.mxu0 0.0
        %397 = vmatpush1.msra.mxu0 0.0
        %398 = vmatprep.subr.mxu0 0.0
        %399 = vmatpush1.msra.mxu0 0.0
        %400 = vmatprep.subr.mxu0 0.0
        %401 = vmatpush1.msra.mxu0 0.0
        %v402 = vand.u32 %v281, 4294901760
        %v403 = vsub.f32 %v281, %v402
        %v404 = vand.u32 %v403, 4294901760
        %v405 = vsub.f32 %v403, %v404
        %v406 = vand.u32 %v405, 4294901760
        %407 = vmatprep.subr.mxu0 %v406
        %v408 = vand.u32 %v279, 4294901760
        %v409 = vsub.f32 %v279, %v408
        %v410 = vand.u32 %v409, 4294901760
        %v411 = vsub.f32 %v409, %v410
        %v412 = vand.u32 %v411, 4294901760
        %413 = vmatpush1.msra.mxu0 %v412
        %414 = vmatprep.subr.mxu0 0.0
        %415 = vmatpush2.msra.mxu0 0.0
        %416 = vmatprep.subr.mxu0 0.0
        %417 = vmatpush2.msra.mxu0 0.0
        %418 = vmatprep.subr.mxu0 0.0
        %419 = vmatpush2.msra.mxu0 0.0
        %420 = vmatprep.subr.mxu0 0.0
        %421 = vmatpush2.msra.mxu0 0.0
        %422 = vmatprep.subr.mxu0 0.0
        %423 = vmatpush2.msra.mxu0 0.0
        %424 = vmatprep.subr.mxu0 0.0
        %425 = vmatpush2.msra.mxu0 0.0
        %426 = vmatprep.subr.mxu0 0.0
        %427 = vmatpush2.msra.mxu0 0.0
        %428 = vmatprep.subr.mxu0 0.0
        %429 = vmatpush2.msra.mxu0 0.0
        %430 = vmatprep.subr.mxu0 0.0
        %431 = vmatpush2.msra.mxu0 0.0
        %432 = vmatprep.subr.mxu0 0.0
        %433 = vmatpush2.msra.mxu0 0.0
        %434 = vmatprep.subr.mxu0 0.0
        %435 = vmatpush2.msra.mxu0 0.0
        %436 = vmatprep.subr.mxu0 0.0
        %437 = vmatpush2.msra.mxu0 0.0
        %438 = vmatprep.subr.mxu0 0.0
        %439 = vmatpush2.msra.mxu0 0.0
        %440 = vmatprep.subr.mxu0 0.0
        %441 = vmatpush2.msra.mxu0 0.0
        %442 = vmatprep.subr.mxu0 0.0
        %443 = vmatpush2.msra.mxu0 0.0
        %444 = vmatprep.subr.mxu0 0.0
        %445 = vmatpush2.msra.mxu0 0.0
        %446 = vmatprep.mubr.f32.mxu0 0.0
        %v447 = vand.u32 %v273, 4294901760
        %448 = vmatmul.mubr.f32.gmra.mxu0 %v447
        %v449 = vpop.f32.mrf.mxu0
        %v450 = vadd.f32 %v357, %v449
        %v451 = vpop.f32.mrf.mxu0
        %v452 = vadd.f32 %v359, %v451
        %453 = vmatprep.mubr.f32.mxu0 0.0
        %v454 = vand.u32 %v276, 4294901760
        %455 = vmatmul.mubr.f32.gmra.mxu0 %v454
        %v456 = vpop.f32.mrf.mxu0
        %v457 = vadd.f32 %v368, %v456
        %v458 = vpop.f32.mrf.mxu0
        %v459 = vadd.f32 %v370, %v458
        %460 = vdwg.mxu0
        %461 = vmatprep.subr.mxu0 0.0
        %462 = vmatpush1.msra.mxu0 0.0
        %463 = vmatprep.subr.mxu0 0.0
        %464 = vmatpush1.msra.mxu0 0.0
        %465 = vmatprep.subr.mxu0 0.0
        %466 = vmatpush1.msra.mxu0 0.0
        %467 = vmatprep.subr.mxu0 0.0
        %468 = vmatpush1.msra.mxu0 0.0
        %469 = vmatprep.subr.mxu0 0.0
        %470 = vmatpush1.msra.mxu0 0.0
        %471 = vmatprep.subr.mxu0 0.0
        %472 = vmatpush1.msra.mxu0 0.0
        %473 = vmatprep.subr.mxu0 0.0
        %474 = vmatpush1.msra.mxu0 0.0
        %475 = vmatprep.subr.mxu0 0.0
        %476 = vmatpush1.msra.mxu0 0.0
        %477 = vmatprep.subr.mxu0 0.0
        %478 = vmatpush1.msra.mxu0 0.0
        %479 = vmatprep.subr.mxu0 0.0
        %480 = vmatpush1.msra.mxu0 0.0
        %481 = vmatprep.subr.mxu0 0.0
        %482 = vmatpush1.msra.mxu0 0.0
        %483 = vmatprep.subr.mxu0 0.0
        %484 = vmatpush1.msra.mxu0 0.0
        %485 = vmatprep.subr.mxu0 0.0
        %486 = vmatpush1.msra.mxu0 0.0
        %487 = vmatprep.subr.mxu0 0.0
        %488 = vmatpush1.msra.mxu0 0.0
        %489 = vmatprep.subr.mxu0 0.0
        %490 = vmatpush1.msra.mxu0 0.0
        %v491 = vand.u32 %v281, 4294901760
        %v492 = vsub.f32 %v281, %v491
        %493 = vmatprep.subr.mxu0 %v492
        %v494 = vand.u32 %v279, 4294901760
        %v495 = vsub.f32 %v279, %v494
        %496 = vmatpush1.msra.mxu0 %v495
        %497 = vmatprep.subr.mxu0 0.0
        %498 = vmatpush2.msra.mxu0 0.0
        %499 = vmatprep.subr.mxu0 0.0
        %500 = vmatpush2.msra.mxu0 0.0
        %501 = vmatprep.subr.mxu0 0.0
        %502 = vmatpush2.msra.mxu0 0.0
        %503 = vmatprep.subr.mxu0 0.0
        %504 = vmatpush2.msra.mxu0 0.0
        %505 = vmatprep.subr.mxu0 0.0
        %506 = vmatpush2.msra.mxu0 0.0
        %507 = vmatprep.subr.mxu0 0.0
        %508 = vmatpush2.msra.mxu0 0.0
        %509 = vmatprep.subr.mxu0 0.0
        %510 = vmatpush2.msra.mxu0 0.0
        %511 = vmatprep.subr.mxu0 0.0
        %512 = vmatpush2.msra.mxu0 0.0
        %513 = vmatprep.subr.mxu0 0.0
        %514 = vmatpush2.msra.mxu0 0.0
        %515 = vmatprep.subr.mxu0 0.0
        %516 = vmatpush2.msra.mxu0 0.0
        %517 = vmatprep.subr.mxu0 0.0
        %518 = vmatpush2.msra.mxu0 0.0
        %519 = vmatprep.subr.mxu0 0.0
        %520 = vmatpush2.msra.mxu0 0.0
        %521 = vmatprep.subr.mxu0 0.0
        %522 = vmatpush2.msra.mxu0 0.0
        %523 = vmatprep.subr.mxu0 0.0
        %524 = vmatpush2.msra.mxu0 0.0
        %525 = vmatprep.subr.mxu0 0.0
        %526 = vmatpush2.msra.mxu0 0.0
        %527 = vmatprep.subr.mxu0 0.0
        %528 = vmatpush2.msra.mxu0 0.0
        %529 = vmatprep.mubr.f32.mxu0 0.0
        %v530 = vand.u32 %v273, 4294901760
        %v531 = vsub.f32 %v273, %v530
        %532 = vmatmul.mubr.f32.gmra.mxu0 %v531
        %v533 = vpop.f32.mrf.mxu0
        %v534 = vadd.f32 %v450, %v533
        %v535 = vpop.f32.mrf.mxu0
        %v536 = vadd.f32 %v452, %v535
        %537 = vmatprep.mubr.f32.mxu0 0.0
        %v538 = vand.u32 %v276, 4294901760
        %v539 = vsub.f32 %v276, %v538
        %540 = vmatmul.mubr.f32.gmra.mxu0 %v539
        %v541 = vpop.f32.mrf.mxu0
        %v542 = vadd.f32 %v457, %v541
        %v543 = vpop.f32.mrf.mxu0
        %v544 = vadd.f32 %v459, %v543
        %545 = vdwg.mxu0
        %546 = vmatprep.subr.mxu0 0.0
        %547 = vmatpush1.msra.mxu0 0.0
        %548 = vmatprep.subr.mxu0 0.0
        %549 = vmatpush1.msra.mxu0 0.0
        %550 = vmatprep.subr.mxu0 0.0
        %551 = vmatpush1.msra.mxu0 0.0
        %552 = vmatprep.subr.mxu0 0.0
        %553 = vmatpush1.msra.mxu0 0.0
        %554 = vmatprep.subr.mxu0 0.0
        %555 = vmatpush1.msra.mxu0 0.0
        %556 = vmatprep.subr.mxu0 0.0
        %557 = vmatpush1.msra.mxu0 0.0
        %558 = vmatprep.subr.mxu0 0.0
        %559 = vmatpush1.msra.mxu0 0.0
        %560 = vmatprep.subr.mxu0 0.0
        %561 = vmatpush1.msra.mxu0 0.0
        %562 = vmatprep.subr.mxu0 0.0
        %563 = vmatpush1.msra.mxu0 0.0
        %564 = vmatprep.subr.mxu0 0.0
        %565 = vmatpush1.msra.mxu0 0.0
        %566 = vmatprep.subr.mxu0 0.0
        %567 = vmatpush1.msra.mxu0 0.0
        %568 = vmatprep.subr.mxu0 0.0
        %569 = vmatpush1.msra.mxu0 0.0
        %570 = vmatprep.subr.mxu0 0.0
        %571 = vmatpush1.msra.mxu0 0.0
        %572 = vmatprep.subr.mxu0 0.0
        %573 = vmatpush1.msra.mxu0 0.0
        %574 = vmatprep.subr.mxu0 0.0
        %575 = vmatpush1.msra.mxu0 0.0
        %v576 = vand.u32 %v281, 4294901760
        %577 = vmatprep.subr.mxu0 %v576
        %v578 = vand.u32 %v279, 4294901760
        %579 = vmatpush1.msra.mxu0 %v578
        %580 = vmatprep.subr.mxu0 0.0
        %581 = vmatpush2.msra.mxu0 0.0
        %582 = vmatprep.subr.mxu0 0.0
        %583 = vmatpush2.msra.mxu0 0.0
        %584 = vmatprep.subr.mxu0 0.0
        %585 = vmatpush2.msra.mxu0 0.0
        %586 = vmatprep.subr.mxu0 0.0
        %587 = vmatpush2.msra.mxu0 0.0
        %588 = vmatprep.subr.mxu0 0.0
        %589 = vmatpush2.msra.mxu0 0.0
        %590 = vmatprep.subr.mxu0 0.0
        %591 = vmatpush2.msra.mxu0 0.0
        %592 = vmatprep.subr.mxu0 0.0
        %593 = vmatpush2.msra.mxu0 0.0
        %594 = vmatprep.subr.mxu0 0.0
        %595 = vmatpush2.msra.mxu0 0.0
        %596 = vmatprep.subr.mxu0 0.0
        %597 = vmatpush2.msra.mxu0 0.0
        %598 = vmatprep.subr.mxu0 0.0
        %599 = vmatpush2.msra.mxu0 0.0
        %600 = vmatprep.subr.mxu0 0.0
        %601 = vmatpush2.msra.mxu0 0.0
        %602 = vmatprep.subr.mxu0 0.0
        %603 = vmatpush2.msra.mxu0 0.0
        %604 = vmatprep.subr.mxu0 0.0
        %605 = vmatpush2.msra.mxu0 0.0
        %606 = vmatprep.subr.mxu0 0.0
        %607 = vmatpush2.msra.mxu0 0.0
        %608 = vmatprep.subr.mxu0 0.0
        %609 = vmatpush2.msra.mxu0 0.0
        %610 = vmatprep.subr.mxu0 0.0
        %611 = vmatpush2.msra.mxu0 0.0
        %612 = vmatprep.mubr.f32.mxu0 0.0
        %v613 = vand.u32 %v273, 4294901760
        %v614 = vsub.f32 %v273, %v613
        %v615 = vand.u32 %v614, 4294901760
        %616 = vmatmul.mubr.f32.gmra.mxu0 %v615
        %v617 = vpop.f32.mrf.mxu0
        %v618 = vadd.f32 %v534, %v617
        %v619 = vpop.f32.mrf.mxu0
        %v620 = vadd.f32 %v536, %v619
        %621 = vmatprep.mubr.f32.mxu0 0.0
        %v622 = vand.u32 %v276, 4294901760
        %v623 = vsub.f32 %v276, %v622
        %v624 = vand.u32 %v623, 4294901760
        %625 = vmatmul.mubr.f32.gmra.mxu0 %v624
        %v626 = vpop.f32.mrf.mxu0
        %v627 = vadd.f32 %v542, %v626
        %v628 = vpop.f32.mrf.mxu0
        %v629 = vadd.f32 %v544, %v628
        %630 = vdwg.mxu0
        %631 = vmatprep.subr.mxu0 0.0
        %632 = vmatpush1.msra.mxu0 0.0
        %633 = vmatprep.subr.mxu0 0.0
        %634 = vmatpush1.msra.mxu0 0.0
        %635 = vmatprep.subr.mxu0 0.0
        %636 = vmatpush1.msra.mxu0 0.0
        %637 = vmatprep.subr.mxu0 0.0
        %638 = vmatpush1.msra.mxu0 0.0
        %639 = vmatprep.subr.mxu0 0.0
        %640 = vmatpush1.msra.mxu0 0.0
        %641 = vmatprep.subr.mxu0 0.0
        %642 = vmatpush1.msra.mxu0 0.0
        %643 = vmatprep.subr.mxu0 0.0
        %644 = vmatpush1.msra.mxu0 0.0
        %645 = vmatprep.subr.mxu0 0.0
        %646 = vmatpush1.msra.mxu0 0.0
        %647 = vmatprep.subr.mxu0 0.0
        %648 = vmatpush1.msra.mxu0 0.0
        %649 = vmatprep.subr.mxu0 0.0
        %650 = vmatpush1.msra.mxu0 0.0
        %651 = vmatprep.subr.mxu0 0.0
        %652 = vmatpush1.msra.mxu0 0.0
        %653 = vmatprep.subr.mxu0 0.0
        %654 = vmatpush1.msra.mxu0 0.0
        %655 = vmatprep.subr.mxu0 0.0
        %656 = vmatpush1.msra.mxu0 0.0
        %657 = vmatprep.subr.mxu0 0.0
        %658 = vmatpush1.msra.mxu0 0.0
        %659 = vmatprep.subr.mxu0 0.0
        %660 = vmatpush1.msra.mxu0 0.0
        %v661 = vand.u32 %v281, 4294901760
        %v662 = vsub.f32 %v281, %v661
        %v663 = vand.u32 %v662, 4294901760
        %664 = vmatprep.subr.mxu0 %v663
        %v665 = vand.u32 %v279, 4294901760
        %v666 = vsub.f32 %v279, %v665
        %v667 = vand.u32 %v666, 4294901760
        %668 = vmatpush1.msra.mxu0 %v667
        %669 = vmatprep.subr.mxu0 0.0
        %670 = vmatpush2.msra.mxu0 0.0
        %671 = vmatprep.subr.mxu0 0.0
        %672 = vmatpush2.msra.mxu0 0.0
        %673 = vmatprep.subr.mxu0 0.0
        %674 = vmatpush2.msra.mxu0 0.0
        %675 = vmatprep.subr.mxu0 0.0
        %676 = vmatpush2.msra.mxu0 0.0
        %677 = vmatprep.subr.mxu0 0.0
        %678 = vmatpush2.msra.mxu0 0.0
        %679 = vmatprep.subr.mxu0 0.0
        %680 = vmatpush2.msra.mxu0 0.0
        %681 = vmatprep.subr.mxu0 0.0
        %682 = vmatpush2.msra.mxu0 0.0
        %683 = vmatprep.subr.mxu0 0.0
        %684 = vmatpush2.msra.mxu0 0.0
        %685 = vmatprep.subr.mxu0 0.0
        %686 = vmatpush2.msra.mxu0 0.0
        %687 = vmatprep.subr.mxu0 0.0
        %688 = vmatpush2.msra.mxu0 0.0
        %689 = vmatprep.subr.mxu0 0.0
        %690 = vmatpush2.msra.mxu0 0.0
        %691 = vmatprep.subr.mxu0 0.0
        %692 = vmatpush2.msra.mxu0 0.0
        %693 = vmatprep.subr.mxu0 0.0
        %694 = vmatpush2.msra.mxu0 0.0
        %695 = vmatprep.subr.mxu0 0.0
        %696 = vmatpush2.msra.mxu0 0.0
        %697 = vmatprep.subr.mxu0 0.0
        %698 = vmatpush2.msra.mxu0 0.0
        %699 = vmatprep.subr.mxu0 0.0
        %700 = vmatpush2.msra.mxu0 0.0
        %701 = vmatprep.mubr.f32.mxu0 0.0
        %v702 = vand.u32 %v273, 4294901760
        %703 = vmatmul.mubr.f32.gmra.mxu0 %v702
        %v704 = vpop.f32.mrf.mxu0
        %v705 = vadd.f32 %v618, %v704
        %v706 = vpop.f32.mrf.mxu0
        %v707 = vadd.f32 %v620, %v706
        %708 = vmatprep.mubr.f32.mxu0 0.0
        %v709 = vand.u32 %v276, 4294901760
        %710 = vmatmul.mubr.f32.gmra.mxu0 %v709
        %v711 = vpop.f32.mrf.mxu0
        %v712 = vadd.f32 %v627, %v711
        %v713 = vpop.f32.mrf.mxu0
        %v714 = vadd.f32 %v629, %v713
        %715 = vdwg.mxu0
        %716 = vmatprep.subr.mxu0 0.0
        %717 = vmatpush1.msra.mxu0 0.0
        %718 = vmatprep.subr.mxu0 0.0
        %719 = vmatpush1.msra.mxu0 0.0
        %720 = vmatprep.subr.mxu0 0.0
        %721 = vmatpush1.msra.mxu0 0.0
        %722 = vmatprep.subr.mxu0 0.0
        %723 = vmatpush1.msra.mxu0 0.0
        %724 = vmatprep.subr.mxu0 0.0
        %725 = vmatpush1.msra.mxu0 0.0
        %726 = vmatprep.subr.mxu0 0.0
        %727 = vmatpush1.msra.mxu0 0.0
        %728 = vmatprep.subr.mxu0 0.0
        %729 = vmatpush1.msra.mxu0 0.0
        %730 = vmatprep.subr.mxu0 0.0
        %731 = vmatpush1.msra.mxu0 0.0
        %732 = vmatprep.subr.mxu0 0.0
        %733 = vmatpush1.msra.mxu0 0.0
        %734 = vmatprep.subr.mxu0 0.0
        %735 = vmatpush1.msra.mxu0 0.0
        %736 = vmatprep.subr.mxu0 0.0
        %737 = vmatpush1.msra.mxu0 0.0
        %738 = vmatprep.subr.mxu0 0.0
        %739 = vmatpush1.msra.mxu0 0.0
        %740 = vmatprep.subr.mxu0 0.0
        %741 = vmatpush1.msra.mxu0 0.0
        %742 = vmatprep.subr.mxu0 0.0
        %743 = vmatpush1.msra.mxu0 0.0
        %744 = vmatprep.subr.mxu0 0.0
        %745 = vmatpush1.msra.mxu0 0.0
        %v746 = vand.u32 %v281, 4294901760
        %747 = vmatprep.subr.mxu0 %v746
        %v748 = vand.u32 %v279, 4294901760
        %749 = vmatpush1.msra.mxu0 %v748
        %750 = vmatprep.subr.mxu0 0.0
        %751 = vmatpush2.msra.mxu0 0.0
        %752 = vmatprep.subr.mxu0 0.0
        %753 = vmatpush2.msra.mxu0 0.0
        %754 = vmatprep.subr.mxu0 0.0
        %755 = vmatpush2.msra.mxu0 0.0
        %756 = vmatprep.subr.mxu0 0.0
        %757 = vmatpush2.msra.mxu0 0.0
        %758 = vmatprep.subr.mxu0 0.0
        %759 = vmatpush2.msra.mxu0 0.0
        %760 = vmatprep.subr.mxu0 0.0
        %761 = vmatpush2.msra.mxu0 0.0
        %762 = vmatprep.subr.mxu0 0.0
        %763 = vmatpush2.msra.mxu0 0.0
        %764 = vmatprep.subr.mxu0 0.0
        %765 = vmatpush2.msra.mxu0 0.0
        %766 = vmatprep.subr.mxu0 0.0
        %767 = vmatpush2.msra.mxu0 0.0
        %768 = vmatprep.subr.mxu0 0.0
        %769 = vmatpush2.msra.mxu0 0.0
        %770 = vmatprep.subr.mxu0 0.0
        %771 = vmatpush2.msra.mxu0 0.0
        %772 = vmatprep.subr.mxu0 0.0
        %773 = vmatpush2.msra.mxu0 0.0
        %774 = vmatprep.subr.mxu0 0.0
        %775 = vmatpush2.msra.mxu0 0.0
        %776 = vmatprep.subr.mxu0 0.0
        %777 = vmatpush2.msra.mxu0 0.0
        %778 = vmatprep.subr.mxu0 0.0
        %779 = vmatpush2.msra.mxu0 0.0
        %780 = vmatprep.subr.mxu0 0.0
        %781 = vmatpush2.msra.mxu0 0.0
        %782 = vmatprep.mubr.f32.mxu0 0.0
        %v783 = vand.u32 %v273, 4294901760
        %784 = vmatmul.mubr.f32.gmra.mxu0 %v783
        %v785 = vpop.f32.mrf.mxu0
        %v786 = vadd.f32 %v705, %v785
        %v787 = vpop.f32.mrf.mxu0
        %v788 = vadd.f32 %v707, %v787
        %789 = vmatprep.mubr.f32.mxu0 0.0
        %v790 = vand.u32 %v276, 4294901760
        %791 = vmatmul.mubr.f32.gmra.mxu0 %v790
        %v792 = vpop.f32.mrf.mxu0
        %v793 = vadd.f32 %v712, %v792
        %v794 = vpop.f32.mrf.mxu0
        %v795 = vadd.f32 %v714, %v794
        %796 = vdwg.mxu0
        %v797 = vmul.f32 %v793, 0.5
        %v798 = vmul.f32 %v795, 0.5
        %v799 = vmul.f32 %v793, 0.70710677
        %v800 = vmul.f32 %v795, 0.70710677
        %v801 = verf.f32.pop %v799
        %v802 = verf.f32.pop %v800
        %v803 = vadd.f32 %v801, 1.0
        %v804 = vadd.f32 %v802, 1.0
        %v805 = vmul.f32 %v797, %v803
        %v806 = vmul.f32 %v798, %v804
        %v807 = vmul.f32 %v786, %v805
        %v808 = vmul.f32 %v788, %v806
        %v809 = vld [vmem:[%s3] sm:$0xf]
        %v810 = vld [vmem:[%s4] sm:$0xf]
        %812 = vset.pattern.permute.xlu0 0
        %813 = vperm.xlu0 %812, %v810
        %v814 = vpop.permute.xlu0 %813
        %vm816 = vcmask 64512
        %v818 = vsel %vm816, %v809, 0
        %820 = vmatprep.subr.mxu0 0.0
        %821 = vmatpush1.msra.mxu0 0.0
        %822 = vmatprep.subr.mxu0 0.0
        %823 = vmatpush1.msra.mxu0 0.0
        %824 = vmatprep.subr.mxu0 0.0
        %825 = vmatpush1.msra.mxu0 0.0
        %826 = vmatprep.subr.mxu0 0.0
        %827 = vmatpush1.msra.mxu0 0.0
        %828 = vmatprep.subr.mxu0 0.0
        %829 = vmatpush1.msra.mxu0 0.0
        %830 = vmatprep.subr.mxu0 0.0
        %831 = vmatpush1.msra.mxu0 0.0
        %832 = vmatprep.subr.mxu0 0.0
        %833 = vmatpush1.msra.mxu0 0.0
        %834 = vmatprep.subr.mxu0 0.0
        %835 = vmatpush1.msra.mxu0 0.0
        %836 = vmatprep.subr.mxu0 0.0
        %837 = vmatpush1.msra.mxu0 0.0
        %838 = vmatprep.subr.mxu0 0.0
        %839 = vmatpush1.msra.mxu0 0.0
        %840 = vmatprep.subr.mxu0 0.0
        %841 = vmatpush1.msra.mxu0 0.0
        %842 = vmatprep.subr.mxu0 0.0
        %843 = vmatpush1.msra.mxu0 0.0
        %844 = vmatprep.subr.mxu0 0.0
        %845 = vmatpush1.msra.mxu0 0.0
        %846 = vmatprep.subr.mxu0 0.0
        %847 = vmatpush1.msra.mxu0 0.0
        %848 = vmatprep.subr.mxu0 0.0
        %849 = vmatpush1.msra.mxu0 0.0
        %v850 = vand.u32 %v808, 4294901760
        %851 = vmatprep.subr.mxu0 %v850
        %v852 = vand.u32 %v807, 4294901760
        %853 = vmatpush1.msra.mxu0 %v852
        %854 = vmatprep.subr.mxu0 0.0
        %855 = vmatpush2.msra.mxu0 0.0
        %856 = vmatprep.subr.mxu0 0.0
        %857 = vmatpush2.msra.mxu0 0.0
        %858 = vmatprep.subr.mxu0 0.0
        %859 = vmatpush2.msra.mxu0 0.0
        %860 = vmatprep.subr.mxu0 0.0
        %861 = vmatpush2.msra.mxu0 0.0
        %862 = vmatprep.subr.mxu0 0.0
        %863 = vmatpush2.msra.mxu0 0.0
        %864 = vmatprep.subr.mxu0 0.0
        %865 = vmatpush2.msra.mxu0 0.0
        %866 = vmatprep.subr.mxu0 0.0
        %867 = vmatpush2.msra.mxu0 0.0
        %868 = vmatprep.subr.mxu0 0.0
        %869 = vmatpush2.msra.mxu0 0.0
        %870 = vmatprep.subr.mxu0 0.0
        %871 = vmatpush2.msra.mxu0 0.0
        %872 = vmatprep.subr.mxu0 0.0
        %873 = vmatpush2.msra.mxu0 0.0
        %874 = vmatprep.subr.mxu0 0.0
        %875 = vmatpush2.msra.mxu0 0.0
        %876 = vmatprep.subr.mxu0 0.0
        %877 = vmatpush2.msra.mxu0 0.0
        %878 = vmatprep.subr.mxu0 0.0
        %879 = vmatpush2.msra.mxu0 0.0
        %880 = vmatprep.subr.mxu0 0.0
        %881 = vmatpush2.msra.mxu0 0.0
        %882 = vmatprep.subr.mxu0 0.0
        %883 = vmatpush2.msra.mxu0 0.0
        %884 = vmatprep.subr.mxu0 0.0
        %885 = vmatpush2.msra.mxu0 0.0
        %886 = vmatprep.mubr.f32.mxu0 0.0
        %v887 = vand.u32 %v818, 4294901760
        %v888 = vsub.f32 %v818, %v887
        %v889 = vand.u32 %v888, 4294901760
        %v890 = vsub.f32 %v888, %v889
        %v891 = vand.u32 %v890, 4294901760
        %892 = vmatmul.mubr.f32.gmra.mxu0 %v891
        %v893 = vpop.f32.mrf.mxu0
        %v894 = vadd.f32 %v814, %v893
        %v895 = vpop.f32.mrf.mxu0
        %v896 = vadd.f32 %v814, %v895
        %897 = vdwg.mxu0
        %898 = vmatprep.subr.mxu0 0.0
        %899 = vmatpush1.msra.mxu0 0.0
        %900 = vmatprep.subr.mxu0 0.0
        %901 = vmatpush1.msra.mxu0 0.0
        %902 = vmatprep.subr.mxu0 0.0
        %903 = vmatpush1.msra.mxu0 0.0
        %904 = vmatprep.subr.mxu0 0.0
        %905 = vmatpush1.msra.mxu0 0.0
        %906 = vmatprep.subr.mxu0 0.0
        %907 = vmatpush1.msra.mxu0 0.0
        %908 = vmatprep.subr.mxu0 0.0
        %909 = vmatpush1.msra.mxu0 0.0
        %910 = vmatprep.subr.mxu0 0.0
        %911 = vmatpush1.msra.mxu0 0.0
        %912 = vmatprep.subr.mxu0 0.0
        %913 = vmatpush1.msra.mxu0 0.0
        %914 = vmatprep.subr.mxu0 0.0
        %915 = vmatpush1.msra.mxu0 0.0
        %916 = vmatprep.subr.mxu0 0.0
        %917 = vmatpush1.msra.mxu0 0.0
        %918 = vmatprep.subr.mxu0 0.0
        %919 = vmatpush1.msra.mxu0 0.0
        %920 = vmatprep.subr.mxu0 0.0
        %921 = vmatpush1.msra.mxu0 0.0
        %922 = vmatprep.subr.mxu0 0.0
        %923 = vmatpush1.msra.mxu0 0.0
        %924 = vmatprep.subr.mxu0 0.0
        %925 = vmatpush1.msra.mxu0 0.0
        %926 = vmatprep.subr.mxu0 0.0
        %927 = vmatpush1.msra.mxu0 0.0
        %v928 = vand.u32 %v808, 4294901760
        %v929 = vsub.f32 %v808, %v928
        %v930 = vand.u32 %v929, 4294901760
        %v931 = vsub.f32 %v929, %v930
        %v932 = vand.u32 %v931, 4294901760
        %933 = vmatprep.subr.mxu0 %v932
        %v934 = vand.u32 %v807, 4294901760
        %v935 = vsub.f32 %v807, %v934
        %v936 = vand.u32 %v935, 4294901760
        %v937 = vsub.f32 %v935, %v936
        %v938 = vand.u32 %v937, 4294901760
        %939 = vmatpush1.msra.mxu0 %v938
        %940 = vmatprep.subr.mxu0 0.0
        %941 = vmatpush2.msra.mxu0 0.0
        %942 = vmatprep.subr.mxu0 0.0
        %943 = vmatpush2.msra.mxu0 0.0
        %944 = vmatprep.subr.mxu0 0.0
        %945 = vmatpush2.msra.mxu0 0.0
        %946 = vmatprep.subr.mxu0 0.0
        %947 = vmatpush2.msra.mxu0 0.0
        %948 = vmatprep.subr.mxu0 0.0
        %949 = vmatpush2.msra.mxu0 0.0
        %950 = vmatprep.subr.mxu0 0.0
        %951 = vmatpush2.msra.mxu0 0.0
        %952 = vmatprep.subr.mxu0 0.0
        %953 = vmatpush2.msra.mxu0 0.0
        %954 = vmatprep.subr.mxu0 0.0
        %955 = vmatpush2.msra.mxu0 0.0
        %956 = vmatprep.subr.mxu0 0.0
        %957 = vmatpush2.msra.mxu0 0.0
        %958 = vmatprep.subr.mxu0 0.0
        %959 = vmatpush2.msra.mxu0 0.0
        %960 = vmatprep.subr.mxu0 0.0
        %961 = vmatpush2.msra.mxu0 0.0
        %962 = vmatprep.subr.mxu0 0.0
        %963 = vmatpush2.msra.mxu0 0.0
        %964 = vmatprep.subr.mxu0 0.0
        %965 = vmatpush2.msra.mxu0 0.0
        %966 = vmatprep.subr.mxu0 0.0
        %967 = vmatpush2.msra.mxu0 0.0
        %968 = vmatprep.subr.mxu0 0.0
        %969 = vmatpush2.msra.mxu0 0.0
        %970 = vmatprep.subr.mxu0 0.0
        %971 = vmatpush2.msra.mxu0 0.0
        %972 = vmatprep.mubr.f32.mxu0 0.0
        %v973 = vand.u32 %v818, 4294901760
        %974 = vmatmul.mubr.f32.gmra.mxu0 %v973
        %v975 = vpop.f32.mrf.mxu0
        %v976 = vadd.f32 %v894, %v975
        %v977 = vpop.f32.mrf.mxu0
        %v978 = vadd.f32 %v896, %v977
        %979 = vdwg.mxu0
        %980 = vmatprep.subr.mxu0 0.0
        %981 = vmatpush1.msra.mxu0 0.0
        %982 = vmatprep.subr.mxu0 0.0
        %983 = vmatpush1.msra.mxu0 0.0
        %984 = vmatprep.subr.mxu0 0.0
        %985 = vmatpush1.msra.mxu0 0.0
        %986 = vmatprep.subr.mxu0 0.0
        %987 = vmatpush1.msra.mxu0 0.0
        %988 = vmatprep.subr.mxu0 0.0
        %989 = vmatpush1.msra.mxu0 0.0
        %990 = vmatprep.subr.mxu0 0.0
        %991 = vmatpush1.msra.mxu0 0.0
        %992 = vmatprep.subr.mxu0 0.0
        %993 = vmatpush1.msra.mxu0 0.0
        %994 = vmatprep.subr.mxu0 0.0
        %995 = vmatpush1.msra.mxu0 0.0
        %996 = vmatprep.subr.mxu0 0.0
        %997 = vmatpush1.msra.mxu0 0.0
        %998 = vmatprep.subr.mxu0 0.0
        %999 = vmatpush1.msra.mxu0 0.0
        %1000 = vmatprep.subr.mxu0 0.0
        %1001 = vmatpush1.msra.mxu0 0.0
        %1002 = vmatprep.subr.mxu0 0.0
        %1003 = vmatpush1.msra.mxu0 0.0
        %1004 = vmatprep.subr.mxu0 0.0
        %1005 = vmatpush1.msra.mxu0 0.0
        %1006 = vmatprep.subr.mxu0 0.0
        %1007 = vmatpush1.msra.mxu0 0.0
        %1008 = vmatprep.subr.mxu0 0.0
        %1009 = vmatpush1.msra.mxu0 0.0
        %v1010 = vand.u32 %v808, 4294901760
        %v1011 = vsub.f32 %v808, %v1010
        %1012 = vmatprep.subr.mxu0 %v1011
        %v1013 = vand.u32 %v807, 4294901760
        %v1014 = vsub.f32 %v807, %v1013
        %1015 = vmatpush1.msra.mxu0 %v1014
        %1016 = vmatprep.subr.mxu0 0.0
        %1017 = vmatpush2.msra.mxu0 0.0
        %1018 = vmatprep.subr.mxu0 0.0
        %1019 = vmatpush2.msra.mxu0 0.0
        %1020 = vmatprep.subr.mxu0 0.0
        %1021 = vmatpush2.msra.mxu0 0.0
        %1022 = vmatprep.subr.mxu0 0.0
        %1023 = vmatpush2.msra.mxu0 0.0
        %1024 = vmatprep.subr.mxu0 0.0
        %1025 = vmatpush2.msra.mxu0 0.0
        %1026 = vmatprep.subr.mxu0 0.0
        %1027 = vmatpush2.msra.mxu0 0.0
        %1028 = vmatprep.subr.mxu0 0.0
        %1029 = vmatpush2.msra.mxu0 0.0
        %1030 = vmatprep.subr.mxu0 0.0
        %1031 = vmatpush2.msra.mxu0 0.0
        %1032 = vmatprep.subr.mxu0 0.0
        %1033 = vmatpush2.msra.mxu0 0.0
        %1034 = vmatprep.subr.mxu0 0.0
        %1035 = vmatpush2.msra.mxu0 0.0
        %1036 = vmatprep.subr.mxu0 0.0
        %1037 = vmatpush2.msra.mxu0 0.0
        %1038 = vmatprep.subr.mxu0 0.0
        %1039 = vmatpush2.msra.mxu0 0.0
        %1040 = vmatprep.subr.mxu0 0.0
        %1041 = vmatpush2.msra.mxu0 0.0
        %1042 = vmatprep.subr.mxu0 0.0
        %1043 = vmatpush2.msra.mxu0 0.0
        %1044 = vmatprep.subr.mxu0 0.0
        %1045 = vmatpush2.msra.mxu0 0.0
        %1046 = vmatprep.subr.mxu0 0.0
        %1047 = vmatpush2.msra.mxu0 0.0
        %1048 = vmatprep.mubr.f32.mxu0 0.0
        %v1049 = vand.u32 %v818, 4294901760
        %v1050 = vsub.f32 %v818, %v1049
        %1051 = vmatmul.mubr.f32.gmra.mxu0 %v1050
        %v1052 = vpop.f32.mrf.mxu0
        %v1053 = vadd.f32 %v976, %v1052
        %v1054 = vpop.f32.mrf.mxu0
        %v1055 = vadd.f32 %v978, %v1054
        %1056 = vdwg.mxu0
        %1057 = vmatprep.subr.mxu0 0.0
        %1058 = vmatpush1.msra.mxu0 0.0
        %1059 = vmatprep.subr.mxu0 0.0
        %1060 = vmatpush1.msra.mxu0 0.0
        %1061 = vmatprep.subr.mxu0 0.0
        %1062 = vmatpush1.msra.mxu0 0.0
        %1063 = vmatprep.subr.mxu0 0.0
        %1064 = vmatpush1.msra.mxu0 0.0
        %1065 = vmatprep.subr.mxu0 0.0
        %1066 = vmatpush1.msra.mxu0 0.0
        %1067 = vmatprep.subr.mxu0 0.0
        %1068 = vmatpush1.msra.mxu0 0.0
        %1069 = vmatprep.subr.mxu0 0.0
        %1070 = vmatpush1.msra.mxu0 0.0
        %1071 = vmatprep.subr.mxu0 0.0
        %1072 = vmatpush1.msra.mxu0 0.0
        %1073 = vmatprep.subr.mxu0 0.0
        %1074 = vmatpush1.msra.mxu0 0.0
        %1075 = vmatprep.subr.mxu0 0.0
        %1076 = vmatpush1.msra.mxu0 0.0
        %1077 = vmatprep.subr.mxu0 0.0
        %1078 = vmatpush1.msra.mxu0 0.0
        %1079 = vmatprep.subr.mxu0 0.0
        %1080 = vmatpush1.msra.mxu0 0.0
        %1081 = vmatprep.subr.mxu0 0.0
        %1082 = vmatpush1.msra.mxu0 0.0
        %1083 = vmatprep.subr.mxu0 0.0
        %1084 = vmatpush1.msra.mxu0 0.0
        %1085 = vmatprep.subr.mxu0 0.0
        %1086 = vmatpush1.msra.mxu0 0.0
        %v1087 = vand.u32 %v808, 4294901760
        %1088 = vmatprep.subr.mxu0 %v1087
        %v1089 = vand.u32 %v807, 4294901760
        %1090 = vmatpush1.msra.mxu0 %v1089
        %1091 = vmatprep.subr.mxu0 0.0
        %1092 = vmatpush2.msra.mxu0 0.0
        %1093 = vmatprep.subr.mxu0 0.0
        %1094 = vmatpush2.msra.mxu0 0.0
        %1095 = vmatprep.subr.mxu0 0.0
        %1096 = vmatpush2.msra.mxu0 0.0
        %1097 = vmatprep.subr.mxu0 0.0
        %1098 = vmatpush2.msra.mxu0 0.0
        %1099 = vmatprep.subr.mxu0 0.0
        %1100 = vmatpush2.msra.mxu0 0.0
        %1101 = vmatprep.subr.mxu0 0.0
        %1102 = vmatpush2.msra.mxu0 0.0
        %1103 = vmatprep.subr.mxu0 0.0
        %1104 = vmatpush2.msra.mxu0 0.0
        %1105 = vmatprep.subr.mxu0 0.0
        %1106 = vmatpush2.msra.mxu0 0.0
        %1107 = vmatprep.subr.mxu0 0.0
        %1108 = vmatpush2.msra.mxu0 0.0
        %1109 = vmatprep.subr.mxu0 0.0
        %1110 = vmatpush2.msra.mxu0 0.0
        %1111 = vmatprep.subr.mxu0 0.0
        %1112 = vmatpush2.msra.mxu0 0.0
        %1113 = vmatprep.subr.mxu0 0.0
        %1114 = vmatpush2.msra.mxu0 0.0
        %1115 = vmatprep.subr.mxu0 0.0
        %1116 = vmatpush2.msra.mxu0 0.0
        %1117 = vmatprep.subr.mxu0 0.0
        %1118 = vmatpush2.msra.mxu0 0.0
        %1119 = vmatprep.subr.mxu0 0.0
        %1120 = vmatpush2.msra.mxu0 0.0
        %1121 = vmatprep.subr.mxu0 0.0
        %1122 = vmatpush2.msra.mxu0 0.0
        %1123 = vmatprep.mubr.f32.mxu0 0.0
        %v1124 = vand.u32 %v818, 4294901760
        %v1125 = vsub.f32 %v818, %v1124
        %v1126 = vand.u32 %v1125, 4294901760
        %1127 = vmatmul.mubr.f32.gmra.mxu0 %v1126
        %v1128 = vpop.f32.mrf.mxu0
        %v1129 = vadd.f32 %v1053, %v1128
        %v1130 = vpop.f32.mrf.mxu0
        %v1131 = vadd.f32 %v1055, %v1130
        %1132 = vdwg.mxu0
        %1133 = vmatprep.subr.mxu0 0.0
        %1134 = vmatpush1.msra.mxu0 0.0
        %1135 = vmatprep.subr.mxu0 0.0
        %1136 = vmatpush1.msra.mxu0 0.0
        %1137 = vmatprep.subr.mxu0 0.0
        %1138 = vmatpush1.msra.mxu0 0.0
        %1139 = vmatprep.subr.mxu0 0.0
        %1140 = vmatpush1.msra.mxu0 0.0
        %1141 = vmatprep.subr.mxu0 0.0
        %1142 = vmatpush1.msra.mxu0 0.0
        %1143 = vmatprep.subr.mxu0 0.0
        %1144 = vmatpush1.msra.mxu0 0.0
        %1145 = vmatprep.subr.mxu0 0.0
        %1146 = vmatpush1.msra.mxu0 0.0
        %1147 = vmatprep.subr.mxu0 0.0
        %1148 = vmatpush1.msra.mxu0 0.0
        %1149 = vmatprep.subr.mxu0 0.0
        %1150 = vmatpush1.msra.mxu0 0.0
        %1151 = vmatprep.subr.mxu0 0.0
        %1152 = vmatpush1.msra.mxu0 0.0
        %1153 = vmatprep.subr.mxu0 0.0
        %1154 = vmatpush1.msra.mxu0 0.0
        %1155 = vmatprep.subr.mxu0 0.0
        %1156 = vmatpush1.msra.mxu0 0.0
        %1157 = vmatprep.subr.mxu0 0.0
        %1158 = vmatpush1.msra.mxu0 0.0
        %1159 = vmatprep.subr.mxu0 0.0
        %1160 = vmatpush1.msra.mxu0 0.0
        %1161 = vmatprep.subr.mxu0 0.0
        %1162 = vmatpush1.msra.mxu0 0.0
        %v1163 = vand.u32 %v808, 4294901760
        %v1164 = vsub.f32 %v808, %v1163
        %v1165 = vand.u32 %v1164, 4294901760
        %1166 = vmatprep.subr.mxu0 %v1165
        %v1167 = vand.u32 %v807, 4294901760
        %v1168 = vsub.f32 %v807, %v1167
        %v1169 = vand.u32 %v1168, 4294901760
        %1170 = vmatpush1.msra.mxu0 %v1169
        %1171 = vmatprep.subr.mxu0 0.0
        %1172 = vmatpush2.msra.mxu0 0.0
        %1173 = vmatprep.subr.mxu0 0.0
        %1174 = vmatpush2.msra.mxu0 0.0
        %1175 = vmatprep.subr.mxu0 0.0
        %1176 = vmatpush2.msra.mxu0 0.0
        %1177 = vmatprep.subr.mxu0 0.0
        %1178 = vmatpush2.msra.mxu0 0.0
        %1179 = vmatprep.subr.mxu0 0.0
        %1180 = vmatpush2.msra.mxu0 0.0
        %1181 = vmatprep.subr.mxu0 0.0
        %1182 = vmatpush2.msra.mxu0 0.0
        %1183 = vmatprep.subr.mxu0 0.0
        %1184 = vmatpush2.msra.mxu0 0.0
        %1185 = vmatprep.subr.mxu0 0.0
        %1186 = vmatpush2.msra.mxu0 0.0
        %1187 = vmatprep.subr.mxu0 0.0
        %1188 = vmatpush2.msra.mxu0 0.0
        %1189 = vmatprep.subr.mxu0 0.0
        %1190 = vmatpush2.msra.mxu0 0.0
        %1191 = vmatprep.subr.mxu0 0.0
        %1192 = vmatpush2.msra.mxu0 0.0
        %1193 = vmatprep.subr.mxu0 0.0
        %1194 = vmatpush2.msra.mxu0 0.0
        %1195 = vmatprep.subr.mxu0 0.0
        %1196 = vmatpush2.msra.mxu0 0.0
        %1197 = vmatprep.subr.mxu0 0.0
        %1198 = vmatpush2.msra.mxu0 0.0
        %1199 = vmatprep.subr.mxu0 0.0
        %1200 = vmatpush2.msra.mxu0 0.0
        %1201 = vmatprep.subr.mxu0 0.0
        %1202 = vmatpush2.msra.mxu0 0.0
        %1203 = vmatprep.mubr.f32.mxu0 0.0
        %v1204 = vand.u32 %v818, 4294901760
        %1205 = vmatmul.mubr.f32.gmra.mxu0 %v1204
        %v1206 = vpop.f32.mrf.mxu0
        %v1207 = vadd.f32 %v1129, %v1206
        %v1208 = vpop.f32.mrf.mxu0
        %v1209 = vadd.f32 %v1131, %v1208
        %1210 = vdwg.mxu0
        %1211 = vmatprep.subr.mxu0 0.0
        %1212 = vmatpush1.msra.mxu0 0.0
        %1213 = vmatprep.subr.mxu0 0.0
        %1214 = vmatpush1.msra.mxu0 0.0
        %1215 = vmatprep.subr.mxu0 0.0
        %1216 = vmatpush1.msra.mxu0 0.0
        %1217 = vmatprep.subr.mxu0 0.0
        %1218 = vmatpush1.msra.mxu0 0.0
        %1219 = vmatprep.subr.mxu0 0.0
        %1220 = vmatpush1.msra.mxu0 0.0
        %1221 = vmatprep.subr.mxu0 0.0
        %1222 = vmatpush1.msra.mxu0 0.0
        %1223 = vmatprep.subr.mxu0 0.0
        %1224 = vmatpush1.msra.mxu0 0.0
        %1225 = vmatprep.subr.mxu0 0.0
        %1226 = vmatpush1.msra.mxu0 0.0
        %1227 = vmatprep.subr.mxu0 0.0
        %1228 = vmatpush1.msra.mxu0 0.0
        %1229 = vmatprep.subr.mxu0 0.0
        %1230 = vmatpush1.msra.mxu0 0.0
        %1231 = vmatprep.subr.mxu0 0.0
        %1232 = vmatpush1.msra.mxu0 0.0
        %1233 = vmatprep.subr.mxu0 0.0
        %1234 = vmatpush1.msra.mxu0 0.0
        %1235 = vmatprep.subr.mxu0 0.0
        %1236 = vmatpush1.msra.mxu0 0.0
        %1237 = vmatprep.subr.mxu0 0.0
        %1238 = vmatpush1.msra.mxu0 0.0
        %1239 = vmatprep.subr.mxu0 0.0
        %1240 = vmatpush1.msra.mxu0 0.0
        %v1241 = vand.u32 %v808, 4294901760
        %1242 = vmatprep.subr.mxu0 %v1241
        %v1243 = vand.u32 %v807, 4294901760
        %1244 = vmatpush1.msra.mxu0 %v1243
        %1245 = vmatprep.subr.mxu0 0.0
        %1246 = vmatpush2.msra.mxu0 0.0
        %1247 = vmatprep.subr.mxu0 0.0
        %1248 = vmatpush2.msra.mxu0 0.0
        %1249 = vmatprep.subr.mxu0 0.0
        %1250 = vmatpush2.msra.mxu0 0.0
        %1251 = vmatprep.subr.mxu0 0.0
        %1252 = vmatpush2.msra.mxu0 0.0
        %1253 = vmatprep.subr.mxu0 0.0
        %1254 = vmatpush2.msra.mxu0 0.0
        %1255 = vmatprep.subr.mxu0 0.0
        %1256 = vmatpush2.msra.mxu0 0.0
        %1257 = vmatprep.subr.mxu0 0.0
        %1258 = vmatpush2.msra.mxu0 0.0
        %1259 = vmatprep.subr.mxu0 0.0
        %1260 = vmatpush2.msra.mxu0 0.0
        %1261 = vmatprep.subr.mxu0 0.0
        %1262 = vmatpush2.msra.mxu0 0.0
        %1263 = vmatprep.subr.mxu0 0.0
        %1264 = vmatpush2.msra.mxu0 0.0
        %1265 = vmatprep.subr.mxu0 0.0
        %1266 = vmatpush2.msra.mxu0 0.0
        %1267 = vmatprep.subr.mxu0 0.0
        %1268 = vmatpush2.msra.mxu0 0.0
        %1269 = vmatprep.subr.mxu0 0.0
        %1270 = vmatpush2.msra.mxu0 0.0
        %1271 = vmatprep.subr.mxu0 0.0
        %1272 = vmatpush2.msra.mxu0 0.0
        %1273 = vmatprep.subr.mxu0 0.0
        %1274 = vmatpush2.msra.mxu0 0.0
        %1275 = vmatprep.subr.mxu0 0.0
        %1276 = vmatpush2.msra.mxu0 0.0
        %1277 = vmatprep.mubr.f32.mxu0 0.0
        %v1278 = vand.u32 %v818, 4294901760
        %1279 = vmatmul.mubr.f32.gmra.mxu0 %v1278
        %v1280 = vpop.f32.mrf.mxu0
        %v1281 = vadd.f32 %v1207, %v1280
        %v1282 = vpop.f32.mrf.mxu0
        %v1283 = vadd.f32 %v1209, %v1282
        %1284 = vdwg.mxu0
        %v1287 = vcombine.low %v1281, %v1283
        %1289 = vst [vmem:[%s242] sm:$0xff] %v1287
        %s1290 = sand.u32 %s153, 1
        %s1291 = scalar_lea.sflag [#allocation3], %s1290
        %s1292 = sand.u32 %s153, 1
        %s1293 = smul.addr %s1292, 8
        %s1294 = scalar_lea.vmem [#allocation2], %s1293
        // Predicated region
        $region41: #{tpu_custom_call.1} parent=39 // pred_check
          %p1295 = pneg %p163
        $region42: #{tpu_custom_call.1} parent=39 // pred_check_branch
          %1297 = sbr.rel (%p1295) target = $region44
        $region43: #{tpu_custom_call.1} parent=39 // pred_region
          %s1298 = smul.u32 2, %s24
          %s1300 = ssub.s32 128, 128
          %1301 = vsyncadd %s1291, %s1300
          %s1302 = smul.addr %s23, 2
          %s1303 = sadd.s32 %s1298, %s1302
          %s1304 = smul.addr %s1303, 64
          %s1305 = scalar_lea.hbm %s5, %s1304
          %s1307 = sshll.u32 %s1294, 4
          %s1308 = int_to_ptr.vmem [resolvable:$true] %s1307
          %1310 = dma.vmem_to_hbm [thread:$0]  %s1308, 128, %s1305, %s1291
        $region44: #{tpu_custom_call.1} parent=39 // pred_fallthru
          _
      $region40: #{tpu_custom_call.1} parent=5 // pred_fallthru
        _
      %p1311 = scmp.le.s32.totalorder 2, %s14
      // Predicated region
      $region45: #{tpu_custom_call.1} parent=5 // pred_check
        %p1312 = pneg %p1311
      $region46: #{tpu_custom_call.1} parent=5 // pred_check_branch
        %1314 = sbr.rel (%p1312) target = $region48
      $region47: #{tpu_custom_call.1} parent=5 // pred_region
        %s1315 = ssub.s32 %s14, 2
        // Predicated region
        $region49: #{tpu_custom_call.1} parent=47 // pred_check
          %p1316 = pneg %p169
        $region50: #{tpu_custom_call.1} parent=47 // pred_check_branch
          %1318 = sbr.rel (%p1316) target = $region52
        $region51: #{tpu_custom_call.1} parent=47 // pred_region
          %s1319 = sand.u32 %s154, 1
          %s1320 = scalar_lea.sflag [#allocation3], %s1319
          %s1321 = sand.u32 %s154, 1
          %s1322 = smul.addr %s1321, 8
          %s1323 = scalar_lea.vmem [#allocation2], %s1322
          %1324 = dma.done %s1320, 128
        $region52: #{tpu_custom_call.1} parent=47 // pred_fallthru
          _
      $region48: #{tpu_custom_call.1} parent=5 // pred_fallthru
        _
    $region6: #{tpu_custom_call.1} parent=1 // loop_footer
      %s18 = sadd.s32 1, %s14
    $region7: #{tpu_custom_call.1} parent=1 // loop_footer_branch
      %13 = sbr.rel target = $region3
    $region8: #{tpu_custom_call.1} parent=1 // loop_exit
      _
    %1325 = vsyncpa [#allocation3], 1
    %s1326 = scalar_lea.sflag [#allocation3], 1
    %1327 = vsyncpa %s1326, 1

</llo_original>
